<compile_context>
chip_gen: v6e
topology: v6e:2x2x1
jax: 0.10.0
libtpu: 0.0.40
codegen_flags: <defaults>
</compile_context>

<pallas_src>
import functools
import math

import jax
import jax.numpy as jnp
from jax.experimental import pallas as pl
from jax.experimental.pallas import tpu as pltpu


def _proj_kernel(feat_ref, w_self_ref, w_neigh_ref, self_ref, neigh_ref):
    """Fused fc_self / fc_neigh input projections for one row tile."""
    f = feat_ref[...]                                            # (TM, D_in) f32
    self_ref[...] = jnp.dot(f, w_self_ref[...],
                            preferred_element_type=jnp.float32)
    neigh_ref[...] = jnp.dot(f, w_neigh_ref[...],
                             preferred_element_type=jnp.float32
                             ).astype(neigh_ref.dtype)


def _agg_kernel(adj_ref, neigh_proj_ref, self_proj_ref, b_ref, out_ref,
                acc_ref, deg_ref, *, mean, relu):
    """Neighbor aggregation A @ P with mean/relu epilogue."""
    k = pl.program_id(1)

    @pl.when(k == 0)
    def _init():
        acc_ref[...] = jnp.zeros_like(acc_ref)
        if mean:
            deg_ref[...] = jnp.zeros_like(deg_ref)

    a = adj_ref[...]                                             # (TM, TK) bf16 {0,1}
    acc_ref[...] += jnp.dot(a, neigh_proj_ref[...],
                            preferred_element_type=jnp.float32)
    if mean:
        # In-degree of destination rows, accumulated from the same A tiles.
        deg_ref[...] += jnp.sum(a.astype(jnp.float32), axis=1, keepdims=True)

    @pl.when(k == pl.num_programs(1) - 1)
    def _finalize():
        h_neigh = acc_ref[...]
        if mean:
            deg = deg_ref[...]
            inv_deg = jnp.where(deg > 0.0, 1.0 / jnp.maximum(deg, 1.0), 0.0)
            h_neigh = h_neigh * inv_deg                          # (TM,1) broadcast
        rst = self_proj_ref[...] + h_neigh + b_ref[...]          # fc_neigh bias
        if relu:
            rst = jnp.maximum(rst, 0.0)
        out_ref[...] = rst.astype(out_ref.dtype)


def sage_conv(adj, feat, w_self, w_neigh, b_neigh, *, aggr="mean",
              activation="relu", tile=256):
    N, d_in = feat.shape
    d_out = w_self.shape[1]
    assert adj.shape == (N, N)
    assert w_neigh.shape == (d_in, d_out) and b_neigh.shape == (d_out,)
    if aggr not in ("mean", "sum"):
        raise ValueError(f"Expect aggregation to be 'sum' or 'mean', got {aggr}")

    n_pad = int(pl.cdiv(N, tile)) * tile
    d_out_pad = int(pl.cdiv(d_out, 128)) * 128                   # lane-dense output

    adj_b = adj.astype(jnp.bfloat16)                             # 0/1 -> exact bf16
    feat_f = feat.astype(jnp.float32)
    if n_pad != N:
        adj_b = jnp.pad(adj_b, ((0, n_pad - N), (0, n_pad - N)))
        feat_f = jnp.pad(feat_f, ((0, n_pad - N), (0, 0)))

    w_self_p = jnp.zeros((d_in, d_out_pad), jnp.float32).at[:, :d_out].set(
        w_self.astype(jnp.float32))
    w_neigh_p = jnp.zeros((d_in, d_out_pad), jnp.float32).at[:, :d_out].set(
        w_neigh.astype(jnp.float32))
    b_p = jnp.zeros((1, d_out_pad), jnp.float32).at[:, :d_out].set(
        b_neigh.reshape(1, d_out).astype(jnp.float32))

    nb = n_pad // tile

    # ---- Kernel 1: per-row-tile feature projections (single pass over N). ----
    self_proj, neigh_proj = pl.pallas_call(
        _proj_kernel,
        out_shape=(jax.ShapeDtypeStruct((n_pad, d_out_pad), jnp.float32),
                   jax.ShapeDtypeStruct((n_pad, d_out_pad), jnp.bfloat16)),
        grid=(nb,),
        in_specs=[
            pl.BlockSpec((tile, d_in), lambda i: (i, 0)),        # feat row tile
            pl.BlockSpec((d_in, d_out_pad), lambda i: (0, 0)),   # W_self (resident)
            pl.BlockSpec((d_in, d_out_pad), lambda i: (0, 0)),   # W_neigh (resident)
        ],
        out_specs=(pl.BlockSpec((tile, d_out_pad), lambda i: (i, 0)),
                   pl.BlockSpec((tile, d_out_pad), lambda i: (i, 0))),
        compiler_params=pltpu.CompilerParams(
            dimension_semantics=("parallel",)),
    )(feat_f, w_self_p, w_neigh_p)

    # ---- Kernel 2: stream A tiles, aggregate, epilogue. ----
    kernel = functools.partial(_agg_kernel, mean=(aggr == "mean"),
                               relu=(activation == "relu"))
    out = pl.pallas_call(
        kernel,
        out_shape=jax.ShapeDtypeStruct((n_pad, d_out_pad), jnp.float32),
        grid=(nb, nb),                                           # (rows, reduction)
        in_specs=[
            pl.BlockSpec((tile, tile), lambda i, k: (i, k)),          # A tile
            pl.BlockSpec((tile, d_out_pad), lambda i, k: (k, 0)),     # neigh_proj[k]
            pl.BlockSpec((tile, d_out_pad), lambda i, k: (i, 0)),     # self_proj[i]
            pl.BlockSpec((1, d_out_pad), lambda i, k: (0, 0)),        # bias (resident)
        ],
        out_specs=pl.BlockSpec((tile, d_out_pad), lambda i, k: (i, 0)),
        scratch_shapes=[
            pltpu.VMEM((tile, d_out_pad), jnp.float32),   # neighbor accumulator
            pltpu.VMEM((tile, 1), jnp.float32),           # in-degree accumulator
        ],
        compiler_params=pltpu.CompilerParams(
            dimension_semantics=("parallel", "arbitrary")),
    )(adj_b, neigh_proj, self_proj, b_p)

    return out[:N, :d_out]


def xavier_uniform(key, fan_in, fan_out, gain):
    bound = gain * math.sqrt(6.0 / (fan_in + fan_out))
    # W of shape (fan_in, fan_out) — transposed vs torch Linear storage.
    return jax.random.uniform(key, (fan_in, fan_out), jnp.float32, -bound, bound)


if __name__ == "__main__":
    N, D_IN, D_OUT = 512, 64, 32
    key = jax.random.PRNGKey(0)
    k_feat, k_adj, k_ws, k_wn, k_b = jax.random.split(key, 5)

    # Synthetic node features and a random sparse-ish graph (dense adjacency).
    feat = jax.random.normal(k_feat, (N, D_IN), jnp.float32)
    adj = (jax.random.uniform(k_adj, (N, N)) < 0.05).astype(jnp.float32)

    # Deterministic parameter init: xavier_uniform with relu gain (sqrt(2)).
    gain = math.sqrt(2.0)
    w_self = xavier_uniform(k_ws, D_IN, D_OUT, gain)
    w_neigh = xavier_uniform(k_wn, D_IN, D_OUT, gain)
    # nn.Linear default bias init: U(-1/sqrt(fan_in), 1/sqrt(fan_in)).
    b_bound = 1.0 / math.sqrt(D_IN)
    b_neigh = jax.random.uniform(k_b, (D_OUT,), jnp.float32, -b_bound, b_bound)

    out = sage_conv(adj, feat, w_self, w_neigh, b_neigh, aggr="mean")
    out = jax.block_until_ready(out)
    assert out.shape == (N, D_OUT)

    # Reference 1: exact f32 module semantics (loose tol — neigh projection is
    # rounded to bf16 before the A matmul inside the kernel).
    deg = jnp.sum(adj, axis=1, keepdims=True)
    h_neigh_ref = jnp.where(deg > 0, (adj @ feat) / jnp.maximum(deg, 1.0), 0.0)
    ref_f32 = jnp.maximum(feat @ w_self + h_neigh_ref @ w_neigh + b_neigh, 0.0)
    assert jnp.allclose(out, ref_f32, atol=5e-2, rtol=5e-2), \
        float(jnp.max(jnp.abs(out - ref_f32)))

    # Reference 2: matched precision (bf16 neigh projection, f32 accumulation).
    p_ref = (feat @ w_neigh).astype(jnp.bfloat16).astype(jnp.float32)
    inv_deg = jnp.where(deg > 0, 1.0 / jnp.maximum(deg, 1.0), 0.0)
    ref_m = jnp.maximum(feat @ w_self + (adj @ p_ref) * inv_deg + b_neigh, 0.0)
    assert jnp.allclose(out, ref_m, atol=2e-3, rtol=2e-3), \
        float(jnp.max(jnp.abs(out - ref_m)))

    print("KERNEL_OK")
</pallas_src>

<mosaic_0001>
module attributes {stable_mosaic.version = 11 : i64} {
  func.func @_proj_kernel(%arg0: i32, %arg1: memref<256x64xf32, #tpu.memory_space<vmem>>, %arg2: memref<64x128xf32, #tpu.memory_space<vmem>>, %arg3: memref<64x128xf32, #tpu.memory_space<vmem>>, %arg4: memref<256x128xf32, #tpu.memory_space<vmem>>, %arg5: memref<256x128xbf16, #tpu.memory_space<vmem>>) attributes {dimension_semantics = [#tpu.dimension_semantics<parallel>], iteration_bounds = array<i64: 2>, scalar_prefetch = 0 : i64, scratch_operands = 0 : i64, tpu.core_type = #tpu.core_type<tc>, window_params = [{transform_indices = @transform_0, window_bounds = array<i64: 256, 64>}, {pipeline_mode = #tpu.pipeline_mode<synchronous>, transform_indices = @transform_1, window_bounds = array<i64: 64, 128>}, {pipeline_mode = #tpu.pipeline_mode<synchronous>, transform_indices = @transform_2, window_bounds = array<i64: 64, 128>}, {transform_indices = @transform_3, window_bounds = array<i64: 256, 128>}, {transform_indices = @transform_4, window_bounds = array<i64: 256, 128>}]} {
    %c0 = arith.constant 0 : index
    %c0_0 = arith.constant 0 : index
    %0 = vector.load %arg1[%c0, %c0_0] : memref<256x64xf32, #tpu.memory_space<vmem>>, vector<256x64xf32>
    %c0_1 = arith.constant 0 : index
    %c0_2 = arith.constant 0 : index
    %1 = vector.load %arg2[%c0_1, %c0_2] : memref<64x128xf32, #tpu.memory_space<vmem>>, vector<64x128xf32>
    %cst = arith.constant dense<0.000000e+00> : vector<256x128xf32>
    %2 = tpu.matmul %0, %1, %cst {dimension_numbers = #tpu.dot_dimension_numbers<[1], [0], [0], [1], [0, 0, 1, 1], [], []>} : vector<256x64xf32>, vector<64x128xf32>, vector<256x128xf32> -> vector<256x128xf32>
    %c0_3 = arith.constant 0 : index
    %c0_4 = arith.constant 0 : index
    %3 = vector.load %arg4[%c0_3, %c0_4] : memref<256x128xf32, #tpu.memory_space<vmem>>, vector<256x128xf32>
    tpu.vector_store %arg4[%c0_3, %c0_4], %2 {strides = array<i32>} : memref<256x128xf32, #tpu.memory_space<vmem>>, vector<256x128xf32>,
    %c0_5 = arith.constant 0 : index
    %c0_6 = arith.constant 0 : index
    %4 = vector.load %arg3[%c0_5, %c0_6] : memref<64x128xf32, #tpu.memory_space<vmem>>, vector<64x128xf32>
    %cst_7 = arith.constant dense<0.000000e+00> : vector<256x128xf32>
    %5 = tpu.matmul %0, %4, %cst_7 {dimension_numbers = #tpu.dot_dimension_numbers<[1], [0], [0], [1], [0, 0, 1, 1], [], []>} : vector<256x64xf32>, vector<64x128xf32>, vector<256x128xf32> -> vector<256x128xf32>
    %6 = arith.truncf %5 : vector<256x128xf32> to vector<256x128xbf16>
    %c0_8 = arith.constant 0 : index
    %c0_9 = arith.constant 0 : index
    %7 = vector.load %arg5[%c0_8, %c0_9] : memref<256x128xbf16, #tpu.memory_space<vmem>>, vector<256x128xbf16>
    tpu.vector_store %arg5[%c0_8, %c0_9], %6 {strides = array<i32>} : memref<256x128xbf16, #tpu.memory_space<vmem>>, vector<256x128xbf16>,
    return
  }
  func.func @transform_0(%arg0: i32) -> (i32, i32) {
    %c0_i32 = arith.constant 0 : i32
    %c0_i32_0 = arith.constant 0 : i32
    return %arg0, %c0_i32 : i32, i32
  }
  func.func @transform_1(%arg0: i32) -> (i32, i32) {
    %c0_i32 = arith.constant 0 : i32
    %c0_i32_0 = arith.constant 0 : i32
    %c0_i32_1 = arith.constant 0 : i32
    return %c0_i32, %c0_i32_0 : i32, i32
  }
  func.func @transform_2(%arg0: i32) -> (i32, i32) {
    %c0_i32 = arith.constant 0 : i32
    %c0_i32_0 = arith.constant 0 : i32
    %c0_i32_1 = arith.constant 0 : i32
    return %c0_i32, %c0_i32_0 : i32, i32
  }
  func.func @transform_3(%arg0: i32) -> (i32, i32) {
    %c0_i32 = arith.constant 0 : i32
    %c0_i32_0 = arith.constant 0 : i32
    return %arg0, %c0_i32 : i32, i32
  }
  func.func @transform_4(%arg0: i32) -> (i32, i32) {
    %c0_i32 = arith.constant 0 : i32
    %c0_i32_0 = arith.constant 0 : i32
    return %arg0, %c0_i32 : i32, i32
  }
}

</mosaic_0001>

<llo_original>
// kernel: tpu_custom_call.1
$region0: #{tpu_custom_call.1}
  #allocation0 [shape = 'u32[]', space=smem, size = 0x4, offset = 0x4, fixed_abs, tag = 'smem constant byte address 0x4 - core index']
  #allocation1 [shape = 'u32[144,128]{1,0:T(1,128)}', space=vmem, size = 0x12000, scoped, tag = 'internal scratch']
  %s0 = inlined_call_operand.vmem [shape: f32[512,64], index: 0, kind: input, shape index: {}]
  %s1 = inlined_call_operand.vmem [shape: f32[64,128], index: 1, kind: input, shape index: {}]
  %s2 = inlined_call_operand.vmem [shape: f32[64,128], index: 2, kind: input, shape index: {}]
  %s3 = inlined_call_operand.hbm [shape: f32[512,128], index: 3, kind: output, shape index: {0}]
  %s4 = inlined_call_operand.hbm [shape: bf16[512,128], index: 4, kind: output, shape index: {1}]
  %5 = xla_tuple %s3, %s4
  %s6 = sld [smem:[#allocation0]]
  $region53: #{tpu_custom_call.1} parent=0
    _
  %s8 = ssub.s32 1, %s6
  %s9 = scalar_select 0, %s8, %s6
  $region1: #{tpu_custom_call.1} parent=0
    #allocation2 [shape = 'u8[262144]{0}', space=vmem, size = 0x40000, scoped, tag = 'output window, operand 0']
    #allocation3 [shape = 's32[2]{0}', space=sflag, size = 0x8, scoped, tag = 'scoped memory for tpu_custom_call.1']
    #allocation4 [shape = 'u8[131072]{0}', space=vmem, size = 0x20000, scoped, tag = 'output window, operand 1']
    #allocation5 [shape = 's32[2]{0}', space=sflag, size = 0x8, scoped, tag = 'scoped memory for tpu_custom_call.1']
    %10 = vsyncpa [#allocation3], 0
    %s11 = scalar_lea.sflag [#allocation3], 1
    %12 = vsyncpa %s11, 0
    %13 = vsyncpa [#allocation5], 0
    %s14 = scalar_lea.sflag [#allocation5], 1
    %15 = vsyncpa %s14, 0
    loop: start=0, step=1, limit=4
    $region2: #{tpu_custom_call.1} parent=1 // loop_pre_header
      _
    $region3: #{tpu_custom_call.1} parent=1 // loop_header
      %s17 = sphi 0, %s21
      %p18 = scmp.ge.s32.totalorder %s17, 4
      %s27 = sphi 0, %s29
      %s30 = sphi 0, %s27
      %s31 = sphi 0, %s30
      %s47 = sphi 0, %s31
      %s51 = sphi 0, %s51
      %s53 = sphi 0, %s51
      %s54 = sphi 0, %s53
      %s68 = sphi 0, %s54
      %s72 = sphi 0, %s72
      %s74 = sphi 0, %s72
      %s75 = sphi 0, %s74
      %s89 = sphi 0, %s75
      %s95 = sphi 0, %s97
      %s98 = sphi 0, %s95
      %s99 = sphi 0, %s98
      %s115 = sphi 0, %s99
      %s121 = sphi 0, %s123
      %s124 = sphi 0, %s121
      %s125 = sphi 0, %s124
      %s141 = sphi 0, %s125
    $region4: #{tpu_custom_call.1} parent=1 // loop_header_branch
      %20 = sbr.rel (%p18) target = $region8
    $region5: #{tpu_custom_call.1} parent=1 // loop_body
      %s22 = ssub.s32 %s17, 1
      %s23 = ssub.s32 %s17, 2
      %s24 = sadd.s32 %s17, 1
      %s25 = ssub.s32 %s17, %s24
      %p26 = scmp.eq.s32.totalorder %s25, 0
      %s28 = sadd.s32 %s27, 1
      %s29 = scalar_select %p26, %s27, %s28
      %p32 = pneg %p26
      %p33 = scmp.eq.s32.totalorder %s17, 1
      %p34 = por %p32, %p33
      %p35 = scmp.ne.s32.totalorder %s27, %s30
      %p36 = scmp.eq.s32.totalorder %s17, 0
      %p37 = por %p35, %p36
      %p38 = scmp.ne.s32.totalorder %s27, %s30
      %p39 = scmp.eq.s32.totalorder %s22, 1
      %p40 = por %p38, %p39
      %p41 = scmp.ne.s32.totalorder %s30, %s31
      %p42 = scmp.eq.s32.totalorder %s22, 0
      %p43 = por %p41, %p42
      %p44 = scmp.ne.s32.totalorder %s30, %s31
      %p45 = scmp.eq.s32.totalorder %s23, 1
      %p46 = por %p44, %p45
      %p48 = scmp.ne.s32.totalorder %s31, %s47
      %p49 = scmp.eq.s32.totalorder %s23, 0
      %p50 = por %p48, %p49
      %s52 = sadd.s32 %s51, 1
      %p55 = scmp.eq.s32.totalorder %s17, 1
      %p56 = scmp.ne.s32.totalorder %s51, %s53
      %p57 = scmp.eq.s32.totalorder %s17, 0
      %p58 = por %p56, %p57
      %p59 = scmp.ne.s32.totalorder %s51, %s53
      %p60 = scmp.eq.s32.totalorder %s22, 1
      %p61 = por %p59, %p60
      %p62 = scmp.ne.s32.totalorder %s53, %s54
      %p63 = scmp.eq.s32.totalorder %s22, 0
      %p64 = por %p62, %p63
      %p65 = scmp.ne.s32.totalorder %s53, %s54
      %p66 = scmp.eq.s32.totalorder %s23, 1
      %p67 = por %p65, %p66
      %p69 = scmp.ne.s32.totalorder %s54, %s68
      %p70 = scmp.eq.s32.totalorder %s23, 0
      %p71 = por %p69, %p70
      %s73 = sadd.s32 %s72, 1
      %p76 = scmp.eq.s32.totalorder %s17, 1
      %p77 = scmp.ne.s32.totalorder %s72, %s74
      %p78 = scmp.eq.s32.totalorder %s17, 0
      %p79 = por %p77, %p78
      %p80 = scmp.ne.s32.totalorder %s72, %s74
      %p81 = scmp.eq.s32.totalorder %s22, 1
      %p82 = por %p80, %p81
      %p83 = scmp.ne.s32.totalorder %s74, %s75
      %p84 = scmp.eq.s32.totalorder %s22, 0
      %p85 = por %p83, %p84
      %p86 = scmp.ne.s32.totalorder %s74, %s75
      %p87 = scmp.eq.s32.totalorder %s23, 1
      %p88 = por %p86, %p87
      %p90 = scmp.ne.s32.totalorder %s75, %s89
      %p91 = scmp.eq.s32.totalorder %s23, 0
      %p92 = por %p90, %p91
      %s93 = ssub.s32 %s17, %s24
      %p94 = scmp.eq.s32.totalorder %s93, 0
      %s96 = sadd.s32 %s95, 1
      %s97 = scalar_select %p94, %s95, %s96
      %p100 = pneg %p94
      %p101 = scmp.eq.s32.totalorder %s17, 1
      %p102 = por %p100, %p101
      %p103 = scmp.ne.s32.totalorder %s95, %s98
      %p104 = scmp.eq.s32.totalorder %s17, 0
      %p105 = por %p103, %p104
      %p106 = scmp.ne.s32.totalorder %s95, %s98
      %p107 = scmp.eq.s32.totalorder %s22, 1
      %p108 = por %p106, %p107
      %p109 = scmp.ne.s32.totalorder %s98, %s99
      %p110 = scmp.eq.s32.totalorder %s22, 0
      %p111 = por %p109, %p110
      %p112 = scmp.ne.s32.totalorder %s98, %s99
      %p113 = scmp.eq.s32.totalorder %s23, 1
      %p114 = por %p112, %p113
      %p116 = scmp.ne.s32.totalorder %s99, %s115
      %p117 = scmp.eq.s32.totalorder %s23, 0
      %p118 = por %p116, %p117
      %s119 = ssub.s32 %s17, %s24
      %p120 = scmp.eq.s32.totalorder %s119, 0
      %s122 = sadd.s32 %s121, 1
      %s123 = scalar_select %p120, %s121, %s122
      %p126 = pneg %p120
      %p127 = scmp.eq.s32.totalorder %s17, 1
      %p128 = por %p126, %p127
      %p129 = scmp.ne.s32.totalorder %s121, %s124
      %p130 = scmp.eq.s32.totalorder %s17, 0
      %p131 = por %p129, %p130
      %p132 = scmp.ne.s32.totalorder %s121, %s124
      %p133 = scmp.eq.s32.totalorder %s22, 1
      %p134 = por %p132, %p133
      %p135 = scmp.ne.s32.totalorder %s124, %s125
      %p136 = scmp.eq.s32.totalorder %s22, 0
      %p137 = por %p135, %p136
      %p138 = scmp.ne.s32.totalorder %s124, %s125
      %p139 = scmp.eq.s32.totalorder %s23, 1
      %p140 = por %p138, %p139
      %p142 = scmp.ne.s32.totalorder %s125, %s141
      %p143 = scmp.eq.s32.totalorder %s23, 0
      %p144 = por %p142, %p143
      %p145 = scmp.le.s32.totalorder 1, %s17
      %p146 = scmp.lt.s32.totalorder %s17, 3
      %p147 = pnand %p145, %p146
      %p148 = pneg %p147
      // Predicated region
      $region9: #{tpu_custom_call.1} parent=5 // pred_check
        _
      $region10: #{tpu_custom_call.1} parent=5 // pred_check_branch
        %150 = sbr.rel (%p147) target = $region12
      $region11: #{tpu_custom_call.1} parent=5 // pred_region
        %s151 = ssub.s32 %s17, 1
        // Predicated region
        $region13: #{tpu_custom_call.1} parent=11 // pred_check
          %p152 = pneg %p64
        $region14: #{tpu_custom_call.1} parent=11 // pred_check_branch
          %154 = sbr.rel (%p152) target = $region16
        $region15: #{tpu_custom_call.1} parent=11 // pred_region
          _
        $region16: #{tpu_custom_call.1} parent=11 // pred_fallthru
          _
        // Predicated region
        $region17: #{tpu_custom_call.1} parent=11 // pred_check
          %p155 = pneg %p85
        $region18: #{tpu_custom_call.1} parent=11 // pred_check_branch
          %157 = sbr.rel (%p155) target = $region20
        $region19: #{tpu_custom_call.1} parent=11 // pred_region
          _
        $region20: #{tpu_custom_call.1} parent=11 // pred_fallthru
          _
      $region12: #{tpu_custom_call.1} parent=5 // pred_fallthru
        _
      %p158 = scmp.lt.s32.totalorder %s17, 2
      // Predicated region
      $region21: #{tpu_custom_call.1} parent=5 // pred_check
        %p159 = pneg %p158
      $region22: #{tpu_custom_call.1} parent=5 // pred_check_branch
        %161 = sbr.rel (%p159) target = $region24
      $region23: #{tpu_custom_call.1} parent=5 // pred_region
        // Predicated region
        $region25: #{tpu_custom_call.1} parent=23 // pred_check
          %p162 = pneg %p37
        $region26: #{tpu_custom_call.1} parent=23 // pred_check_branch
          %164 = sbr.rel (%p162) target = $region28
        $region27: #{tpu_custom_call.1} parent=23 // pred_region
          %s165 = smul.u32 32, %s17
          %p166 = scmp.lt.s32.totalorder %s165, 63
          %s167 = scalar_select %p166, %s165, 63
          %s168 = smul.addr %s167, 8
          %s169 = scalar_lea.vmem %s0, %s168
          %s170 = smul.u32 32, %s17
        $region28: #{tpu_custom_call.1} parent=23 // pred_fallthru
          _
      $region24: #{tpu_custom_call.1} parent=5 // pred_fallthru
        _
      %p171 = scmp.le.s32.totalorder 1, %s17
      %p172 = scmp.lt.s32.totalorder %s17, 3
      %p173 = pnand %p171, %p172
      %p174 = pneg %p173
      // Predicated region
      $region29: #{tpu_custom_call.1} parent=5 // pred_check
        _
      $region30: #{tpu_custom_call.1} parent=5 // pred_check_branch
        %176 = sbr.rel (%p173) target = $region32
      $region31: #{tpu_custom_call.1} parent=5 // pred_region
        %s177 = ssub.s32 %s17, 1
        %s178 = smul.u32 32, %s22
        %p179 = scmp.lt.s32.totalorder %s178, 63
        %s180 = scalar_select %p179, %s178, 63
        %s181 = smul.addr %s180, 8
        %s182 = scalar_lea.vmem %s0, %s181
        %p183 = pneg %p43
        %p184 = pneg %p40
        %p185 = pneg %p64
        %p186 = pneg %p61
        %p187 = pneg %p85
        %p188 = pneg %p82
        %p189 = pneg %p111
        %p190 = pneg %p108
        %s191 = sand.u32 %s98, 1
        %s192 = scalar_lea.sflag [#allocation3], %s191
        %s193 = sand.u32 %s98, 1
        %s194 = smul.addr %s193, 256
        %s195 = scalar_lea.vmem [#allocation2], %s194
        %p196 = pneg %p137
        %p197 = pneg %p134
        %s198 = sand.u32 %s124, 1
        %s199 = scalar_lea.sflag [#allocation5], %s198
        %s200 = sand.u32 %s124, 1
        %s201 = smul.addr %s200, 128
        %s202 = scalar_lea.vmem [#allocation4], %s201
        %s203 = smul.u32 32, %s22
        %p204 = scmp.lt.s32.totalorder %s203, 63
        %s205 = scalar_select %p204, %s203, 63
        %s206 = smul.addr %s205, 8
        %s207 = scalar_lea.vmem %s0, %s206
        %s208 = smul.u32 32, %s22
        %s209 = smul.u32 32, %s22
        %s210 = smul.u32 32, %s22
        %v211 = vld [vmem:[%s207] sm:$0xff]
        %v212 = vld [vmem:[%s207 + $0x8] sm:$0xff]
        %v213 = vld [vmem:[%s207 + $0x10] sm:$0xff]
        %v214 = vld [vmem:[%s207 + $0x18] sm:$0xff]
        %v215 = vld [vmem:[%s207 + $0x20] sm:$0xff]
        %v216 = vld [vmem:[%s207 + $0x28] sm:$0xff]
        %v217 = vld [vmem:[%s207 + $0x30] sm:$0xff]
        %v218 = vld [vmem:[%s207 + $0x38] sm:$0xff]
        %v219 = vld [vmem:[%s207 + $0x40] sm:$0xff]
        %v220 = vld [vmem:[%s207 + $0x48] sm:$0xff]
        %v221 = vld [vmem:[%s207 + $0x50] sm:$0xff]
        %v222 = vld [vmem:[%s207 + $0x58] sm:$0xff]
        %v223 = vld [vmem:[%s207 + $0x60] sm:$0xff]
        %v224 = vld [vmem:[%s207 + $0x68] sm:$0xff]
        %v225 = vld [vmem:[%s207 + $0x70] sm:$0xff]
        %v226 = vld [vmem:[%s207 + $0x78] sm:$0xff]
        %v227 = vld [vmem:[%s207 + $0x80] sm:$0xff]
        %v228 = vld [vmem:[%s207 + $0x88] sm:$0xff]
        %v229 = vld [vmem:[%s207 + $0x90] sm:$0xff]
        %v230 = vld [vmem:[%s207 + $0x98] sm:$0xff]
        %v231 = vld [vmem:[%s207 + $0xa0] sm:$0xff]
        %v232 = vld [vmem:[%s207 + $0xa8] sm:$0xff]
        %v233 = vld [vmem:[%s207 + $0xb0] sm:$0xff]
        %v234 = vld [vmem:[%s207 + $0xb8] sm:$0xff]
        %v235 = vld [vmem:[%s207 + $0xc0] sm:$0xff]
        %v236 = vld [vmem:[%s207 + $0xc8] sm:$0xff]
        %v237 = vld [vmem:[%s207 + $0xd0] sm:$0xff]
        %v238 = vld [vmem:[%s207 + $0xd8] sm:$0xff]
        %v239 = vld [vmem:[%s207 + $0xe0] sm:$0xff]
        %v240 = vld [vmem:[%s207 + $0xe8] sm:$0xff]
        %v241 = vld [vmem:[%s207 + $0xf0] sm:$0xff]
        %v242 = vld [vmem:[%s207 + $0xf8] sm:$0xff]
        %v243 = vld [vmem:[%s1] sm:$0xff]
        %v244 = vld [vmem:[%s1 + $0x8] sm:$0xff]
        %v245 = vld [vmem:[%s1 + $0x10] sm:$0xff]
        %v246 = vld [vmem:[%s1 + $0x18] sm:$0xff]
        %v247 = vld [vmem:[%s1 + $0x20] sm:$0xff]
        %v248 = vld [vmem:[%s1 + $0x28] sm:$0xff]
        %v249 = vld [vmem:[%s1 + $0x30] sm:$0xff]
        %v250 = vld [vmem:[%s1 + $0x38] sm:$0xff]
        %vm251 = vcmask 523264
        %v253 = vsel %vm251, %v211, 0
        %v256 = vsel %vm251, %v212, 0
        %v259 = vsel %vm251, %v213, 0
        %v262 = vsel %vm251, %v214, 0
        %v265 = vsel %vm251, %v215, 0
        %v268 = vsel %vm251, %v216, 0
        %v271 = vsel %vm251, %v217, 0
        %v274 = vsel %vm251, %v218, 0
        %v277 = vsel %vm251, %v219, 0
        %v280 = vsel %vm251, %v220, 0
        %v283 = vsel %vm251, %v221, 0
        %v286 = vsel %vm251, %v222, 0
        %v289 = vsel %vm251, %v223, 0
        %v292 = vsel %vm251, %v224, 0
        %v295 = vsel %vm251, %v225, 0
        %v298 = vsel %vm251, %v226, 0
        %v301 = vsel %vm251, %v227, 0
        %v304 = vsel %vm251, %v228, 0
        %v307 = vsel %vm251, %v229, 0
        %v310 = vsel %vm251, %v230, 0
        %v313 = vsel %vm251, %v231, 0
        %v316 = vsel %vm251, %v232, 0
        %v319 = vsel %vm251, %v233, 0
        %v322 = vsel %vm251, %v234, 0
        %v325 = vsel %vm251, %v235, 0
        %v328 = vsel %vm251, %v236, 0
        %v331 = vsel %vm251, %v237, 0
        %v334 = vsel %vm251, %v238, 0
        %v337 = vsel %vm251, %v239, 0
        %v340 = vsel %vm251, %v240, 0
        %v343 = vsel %vm251, %v241, 0
        %v346 = vsel %vm251, %v242, 0
        %348 = vmatprep.subr.mxu0 0.0
        %349 = vmatpush1.msra.mxu0 0.0
        %350 = vmatprep.subr.mxu0 0.0
        %351 = vmatpush1.msra.mxu0 0.0
        %352 = vmatprep.subr.mxu0 0.0
        %353 = vmatpush1.msra.mxu0 0.0
        %354 = vmatprep.subr.mxu0 0.0
        %355 = vmatpush1.msra.mxu0 0.0
        %356 = vmatprep.subr.mxu0 0.0
        %357 = vmatpush1.msra.mxu0 0.0
        %358 = vmatprep.subr.mxu0 0.0
        %359 = vmatpush1.msra.mxu0 0.0
        %360 = vmatprep.subr.mxu0 0.0
        %361 = vmatpush1.msra.mxu0 0.0
        %362 = vmatprep.subr.mxu0 0.0
        %363 = vmatpush1.msra.mxu0 0.0
        %364 = vmatprep.subr.mxu0 0.0
        %365 = vmatpush1.msra.mxu0 %v250
        %366 = vmatprep.subr.mxu0 0.0
        %367 = vmatpush1.msra.mxu0 %v249
        %368 = vmatprep.subr.mxu0 0.0
        %369 = vmatpush1.msra.mxu0 %v248
        %370 = vmatprep.subr.mxu0 0.0
        %371 = vmatpush1.msra.mxu0 %v247
        %372 = vmatprep.subr.mxu0 0.0
        %373 = vmatpush1.msra.mxu0 %v246
        %374 = vmatprep.subr.mxu0 0.0
        %375 = vmatpush1.msra.mxu0 %v245
        %376 = vmatprep.subr.mxu0 0.0
        %377 = vmatpush1.msra.mxu0 %v244
        %378 = vmatprep.subr.mxu0 0.0
        %379 = vmatpush1.msra.mxu0 %v243
        %380 = vmatprep.subr.mxu0 0.0
        %381 = vmatpush2.msra.mxu0 0.0
        %382 = vmatprep.subr.mxu0 0.0
        %383 = vmatpush2.msra.mxu0 0.0
        %384 = vmatprep.subr.mxu0 0.0
        %385 = vmatpush2.msra.mxu0 0.0
        %386 = vmatprep.subr.mxu0 0.0
        %387 = vmatpush2.msra.mxu0 0.0
        %388 = vmatprep.subr.mxu0 0.0
        %389 = vmatpush2.msra.mxu0 0.0
        %390 = vmatprep.subr.mxu0 0.0
        %391 = vmatpush2.msra.mxu0 0.0
        %392 = vmatprep.subr.mxu0 0.0
        %393 = vmatpush2.msra.mxu0 0.0
        %394 = vmatprep.subr.mxu0 0.0
        %395 = vmatpush2.msra.mxu0 0.0
        %396 = vmatprep.subr.mxu0 0.0
        %397 = vmatpush2.msra.mxu0 0.0
        %398 = vmatprep.subr.mxu0 0.0
        %399 = vmatpush2.msra.mxu0 0.0
        %400 = vmatprep.subr.mxu0 0.0
        %401 = vmatpush2.msra.mxu0 0.0
        %402 = vmatprep.subr.mxu0 0.0
        %403 = vmatpush2.msra.mxu0 0.0
        %404 = vmatprep.subr.mxu0 0.0
        %405 = vmatpush2.msra.mxu0 0.0
        %406 = vmatprep.subr.mxu0 0.0
        %407 = vmatpush2.msra.mxu0 0.0
        %408 = vmatprep.subr.mxu0 0.0
        %409 = vmatpush2.msra.mxu0 0.0
        %410 = vmatprep.subr.mxu0 0.0
        %411 = vmatpush2.msra.mxu0 0.0
        %412 = vmatprep.mubr.f32.mxu0 0.0
        %413 = vmatmul.mubr.f32.gmra.mxu0 %v253
        %v414 = vpop.f32.mrf.mxu0
        %v415 = vadd.f32 0.0, %v414
        %v416 = vpop.f32.mrf.mxu0
        %417 = vmatprep.mubr.f32.mxu0 0.0
        %418 = vmatmul.mubr.f32.gmra.mxu0 %v256
        %v419 = vpop.f32.mrf.mxu0
        %v420 = vadd.f32 0.0, %v419
        %v421 = vpop.f32.mrf.mxu0
        %422 = vmatprep.mubr.f32.mxu0 0.0
        %423 = vmatmul.mubr.f32.gmra.mxu0 %v259
        %v424 = vpop.f32.mrf.mxu0
        %v425 = vadd.f32 0.0, %v424
        %v426 = vpop.f32.mrf.mxu0
        %427 = vmatprep.mubr.f32.mxu0 0.0
        %428 = vmatmul.mubr.f32.gmra.mxu0 %v262
        %v429 = vpop.f32.mrf.mxu0
        %v430 = vadd.f32 0.0, %v429
        %v431 = vpop.f32.mrf.mxu0
        %432 = vmatprep.mubr.f32.mxu0 0.0
        %433 = vmatmul.mubr.f32.gmra.mxu0 %v265
        %v434 = vpop.f32.mrf.mxu0
        %v435 = vadd.f32 0.0, %v434
        %v436 = vpop.f32.mrf.mxu0
        %437 = vmatprep.mubr.f32.mxu0 0.0
        %438 = vmatmul.mubr.f32.gmra.mxu0 %v268
        %v439 = vpop.f32.mrf.mxu0
        %v440 = vadd.f32 0.0, %v439
        %v441 = vpop.f32.mrf.mxu0
        %442 = vmatprep.mubr.f32.mxu0 0.0
        %443 = vmatmul.mubr.f32.gmra.mxu0 %v271
        %v444 = vpop.f32.mrf.mxu0
        %v445 = vadd.f32 0.0, %v444
        %v446 = vpop.f32.mrf.mxu0
        %447 = vmatprep.mubr.f32.mxu0 0.0
        %448 = vmatmul.mubr.f32.gmra.mxu0 %v274
        %v449 = vpop.f32.mrf.mxu0
        %v450 = vadd.f32 0.0, %v449
        %v451 = vpop.f32.mrf.mxu0
        %452 = vmatprep.mubr.f32.mxu0 0.0
        %453 = vmatmul.mubr.f32.gmra.mxu0 %v277
        %v454 = vpop.f32.mrf.mxu0
        %v455 = vadd.f32 0.0, %v454
        %v456 = vpop.f32.mrf.mxu0
        %457 = vmatprep.mubr.f32.mxu0 0.0
        %458 = vmatmul.mubr.f32.gmra.mxu0 %v280
        %v459 = vpop.f32.mrf.mxu0
        %v460 = vadd.f32 0.0, %v459
        %v461 = vpop.f32.mrf.mxu0
        %462 = vmatprep.mubr.f32.mxu0 0.0
        %463 = vmatmul.mubr.f32.gmra.mxu0 %v283
        %v464 = vpop.f32.mrf.mxu0
        %v465 = vadd.f32 0.0, %v464
        %v466 = vpop.f32.mrf.mxu0
        %467 = vmatprep.mubr.f32.mxu0 0.0
        %468 = vmatmul.mubr.f32.gmra.mxu0 %v286
        %v469 = vpop.f32.mrf.mxu0
        %v470 = vadd.f32 0.0, %v469
        %v471 = vpop.f32.mrf.mxu0
        %472 = vmatprep.mubr.f32.mxu0 0.0
        %473 = vmatmul.mubr.f32.gmra.mxu0 %v289
        %v474 = vpop.f32.mrf.mxu0
        %v475 = vadd.f32 0.0, %v474
        %v476 = vpop.f32.mrf.mxu0
        %477 = vmatprep.mubr.f32.mxu0 0.0
        %478 = vmatmul.mubr.f32.gmra.mxu0 %v292
        %v479 = vpop.f32.mrf.mxu0
        %v480 = vadd.f32 0.0, %v479
        %v481 = vpop.f32.mrf.mxu0
        %482 = vmatprep.mubr.f32.mxu0 0.0
        %483 = vmatmul.mubr.f32.gmra.mxu0 %v295
        %v484 = vpop.f32.mrf.mxu0
        %v485 = vadd.f32 0.0, %v484
        %v486 = vpop.f32.mrf.mxu0
        %487 = vmatprep.mubr.f32.mxu0 0.0
        %488 = vmatmul.mubr.f32.gmra.mxu0 %v298
        %v489 = vpop.f32.mrf.mxu0
        %v490 = vadd.f32 0.0, %v489
        %v491 = vpop.f32.mrf.mxu0
        %492 = vmatprep.mubr.f32.mxu0 0.0
        %493 = vmatmul.mubr.f32.gmra.mxu0 %v301
        %v494 = vpop.f32.mrf.mxu0
        %v495 = vadd.f32 0.0, %v494
        %v496 = vpop.f32.mrf.mxu0
        %497 = vmatprep.mubr.f32.mxu0 0.0
        %498 = vmatmul.mubr.f32.gmra.mxu0 %v304
        %v499 = vpop.f32.mrf.mxu0
        %v500 = vadd.f32 0.0, %v499
        %v501 = vpop.f32.mrf.mxu0
        %502 = vmatprep.mubr.f32.mxu0 0.0
        %503 = vmatmul.mubr.f32.gmra.mxu0 %v307
        %v504 = vpop.f32.mrf.mxu0
        %v505 = vadd.f32 0.0, %v504
        %v506 = vpop.f32.mrf.mxu0
        %507 = vmatprep.mubr.f32.mxu0 0.0
        %508 = vmatmul.mubr.f32.gmra.mxu0 %v310
        %v509 = vpop.f32.mrf.mxu0
        %v510 = vadd.f32 0.0, %v509
        %v511 = vpop.f32.mrf.mxu0
        %512 = vmatprep.mubr.f32.mxu0 0.0
        %513 = vmatmul.mubr.f32.gmra.mxu0 %v313
        %v514 = vpop.f32.mrf.mxu0
        %v515 = vadd.f32 0.0, %v514
        %v516 = vpop.f32.mrf.mxu0
        %517 = vmatprep.mubr.f32.mxu0 0.0
        %518 = vmatmul.mubr.f32.gmra.mxu0 %v316
        %v519 = vpop.f32.mrf.mxu0
        %v520 = vadd.f32 0.0, %v519
        %v521 = vpop.f32.mrf.mxu0
        %522 = vmatprep.mubr.f32.mxu0 0.0
        %523 = vmatmul.mubr.f32.gmra.mxu0 %v319
        %v524 = vpop.f32.mrf.mxu0
        %v525 = vadd.f32 0.0, %v524
        %v526 = vpop.f32.mrf.mxu0
        %527 = vmatprep.mubr.f32.mxu0 0.0
        %528 = vmatmul.mubr.f32.gmra.mxu0 %v322
        %v529 = vpop.f32.mrf.mxu0
        %v530 = vadd.f32 0.0, %v529
        %v531 = vpop.f32.mrf.mxu0
        %532 = vmatprep.mubr.f32.mxu0 0.0
        %533 = vmatmul.mubr.f32.gmra.mxu0 %v325
        %v534 = vpop.f32.mrf.mxu0
        %v535 = vadd.f32 0.0, %v534
        %v536 = vpop.f32.mrf.mxu0
        %537 = vmatprep.mubr.f32.mxu0 0.0
        %538 = vmatmul.mubr.f32.gmra.mxu0 %v328
        %v539 = vpop.f32.mrf.mxu0
        %v540 = vadd.f32 0.0, %v539
        %v541 = vpop.f32.mrf.mxu0
        %542 = vmatprep.mubr.f32.mxu0 0.0
        %543 = vmatmul.mubr.f32.gmra.mxu0 %v331
        %v544 = vpop.f32.mrf.mxu0
        %v545 = vadd.f32 0.0, %v544
        %v546 = vpop.f32.mrf.mxu0
        %547 = vmatprep.mubr.f32.mxu0 0.0
        %548 = vmatmul.mubr.f32.gmra.mxu0 %v334
        %v549 = vpop.f32.mrf.mxu0
        %v550 = vadd.f32 0.0, %v549
        %v551 = vpop.f32.mrf.mxu0
        %552 = vmatprep.mubr.f32.mxu0 0.0
        %553 = vmatmul.mubr.f32.gmra.mxu0 %v337
        %v554 = vpop.f32.mrf.mxu0
        %v555 = vadd.f32 0.0, %v554
        %v556 = vpop.f32.mrf.mxu0
        %557 = vmatprep.mubr.f32.mxu0 0.0
        %558 = vmatmul.mubr.f32.gmra.mxu0 %v340
        %v559 = vpop.f32.mrf.mxu0
        %v560 = vadd.f32 0.0, %v559
        %v561 = vpop.f32.mrf.mxu0
        %562 = vmatprep.mubr.f32.mxu0 0.0
        %563 = vmatmul.mubr.f32.gmra.mxu0 %v343
        %v564 = vpop.f32.mrf.mxu0
        %v565 = vadd.f32 0.0, %v564
        %v566 = vpop.f32.mrf.mxu0
        %567 = vmatprep.mubr.f32.mxu0 0.0
        %568 = vmatmul.mubr.f32.gmra.mxu0 %v346
        %v569 = vpop.f32.mrf.mxu0
        %v570 = vadd.f32 0.0, %v569
        %v571 = vpop.f32.mrf.mxu0
        %572 = vdwg.mxu0
        %573 = vst [vmem:[%s195] sm:$0xff] %v415
        %574 = vst [vmem:[%s195 + $0x8] sm:$0xff] %v420
        %575 = vst [vmem:[%s195 + $0x10] sm:$0xff] %v425
        %576 = vst [vmem:[%s195 + $0x18] sm:$0xff] %v430
        %577 = vst [vmem:[%s195 + $0x20] sm:$0xff] %v435
        %578 = vst [vmem:[%s195 + $0x28] sm:$0xff] %v440
        %579 = vst [vmem:[%s195 + $0x30] sm:$0xff] %v445
        %580 = vst [vmem:[%s195 + $0x38] sm:$0xff] %v450
        %581 = vst [vmem:[%s195 + $0x40] sm:$0xff] %v455
        %582 = vst [vmem:[%s195 + $0x48] sm:$0xff] %v460
        %583 = vst [vmem:[%s195 + $0x50] sm:$0xff] %v465
        %584 = vst [vmem:[%s195 + $0x58] sm:$0xff] %v470
        %585 = vst [vmem:[%s195 + $0x60] sm:$0xff] %v475
        %586 = vst [vmem:[%s195 + $0x68] sm:$0xff] %v480
        %587 = vst [vmem:[%s195 + $0x70] sm:$0xff] %v485
        %588 = vst [vmem:[%s195 + $0x78] sm:$0xff] %v490
        %589 = vst [vmem:[%s195 + $0x80] sm:$0xff] %v495
        %590 = vst [vmem:[%s195 + $0x88] sm:$0xff] %v500
        %591 = vst [vmem:[%s195 + $0x90] sm:$0xff] %v505
        %592 = vst [vmem:[%s195 + $0x98] sm:$0xff] %v510
        %593 = vst [vmem:[%s195 + $0xa0] sm:$0xff] %v515
        %594 = vst [vmem:[%s195 + $0xa8] sm:$0xff] %v520
        %595 = vst [vmem:[%s195 + $0xb0] sm:$0xff] %v525
        %596 = vst [vmem:[%s195 + $0xb8] sm:$0xff] %v530
        %597 = vst [vmem:[%s195 + $0xc0] sm:$0xff] %v535
        %598 = vst [vmem:[%s195 + $0xc8] sm:$0xff] %v540
        %599 = vst [vmem:[%s195 + $0xd0] sm:$0xff] %v545
        %600 = vst [vmem:[%s195 + $0xd8] sm:$0xff] %v550
        %601 = vst [vmem:[%s195 + $0xe0] sm:$0xff] %v555
        %602 = vst [vmem:[%s195 + $0xe8] sm:$0xff] %v560
        %603 = vst [vmem:[%s195 + $0xf0] sm:$0xff] %v565
        %604 = vst [vmem:[%s195 + $0xf8] sm:$0xff] %v570
        %v605 = vld [vmem:[%s2] sm:$0xff]
        %v606 = vld [vmem:[%s2 + $0x8] sm:$0xff]
        %v607 = vld [vmem:[%s2 + $0x10] sm:$0xff]
        %v608 = vld [vmem:[%s2 + $0x18] sm:$0xff]
        %v609 = vld [vmem:[%s2 + $0x20] sm:$0xff]
        %v610 = vld [vmem:[%s2 + $0x28] sm:$0xff]
        %v611 = vld [vmem:[%s2 + $0x30] sm:$0xff]
        %v612 = vld [vmem:[%s2 + $0x38] sm:$0xff]
        %613 = vmatprep.subr.mxu0 0.0
        %614 = vmatpush1.msra.mxu0 0.0
        %615 = vmatprep.subr.mxu0 0.0
        %616 = vmatpush1.msra.mxu0 0.0
        %617 = vmatprep.subr.mxu0 0.0
        %618 = vmatpush1.msra.mxu0 0.0
        %619 = vmatprep.subr.mxu0 0.0
        %620 = vmatpush1.msra.mxu0 0.0
        %621 = vmatprep.subr.mxu0 0.0
        %622 = vmatpush1.msra.mxu0 0.0
        %623 = vmatprep.subr.mxu0 0.0
        %624 = vmatpush1.msra.mxu0 0.0
        %625 = vmatprep.subr.mxu0 0.0
        %626 = vmatpush1.msra.mxu0 0.0
        %627 = vmatprep.subr.mxu0 0.0
        %628 = vmatpush1.msra.mxu0 0.0
        %629 = vmatprep.subr.mxu0 0.0
        %630 = vmatpush1.msra.mxu0 %v612
        %631 = vmatprep.subr.mxu0 0.0
        %632 = vmatpush1.msra.mxu0 %v611
        %633 = vmatprep.subr.mxu0 0.0
        %634 = vmatpush1.msra.mxu0 %v610
        %635 = vmatprep.subr.mxu0 0.0
        %636 = vmatpush1.msra.mxu0 %v609
        %637 = vmatprep.subr.mxu0 0.0
        %638 = vmatpush1.msra.mxu0 %v608
        %639 = vmatprep.subr.mxu0 0.0
        %640 = vmatpush1.msra.mxu0 %v607
        %641 = vmatprep.subr.mxu0 0.0
        %642 = vmatpush1.msra.mxu0 %v606
        %643 = vmatprep.subr.mxu0 0.0
        %644 = vmatpush1.msra.mxu0 %v605
        %645 = vmatprep.subr.mxu0 0.0
        %646 = vmatpush2.msra.mxu0 0.0
        %647 = vmatprep.subr.mxu0 0.0
        %648 = vmatpush2.msra.mxu0 0.0
        %649 = vmatprep.subr.mxu0 0.0
        %650 = vmatpush2.msra.mxu0 0.0
        %651 = vmatprep.subr.mxu0 0.0
        %652 = vmatpush2.msra.mxu0 0.0
        %653 = vmatprep.subr.mxu0 0.0
        %654 = vmatpush2.msra.mxu0 0.0
        %655 = vmatprep.subr.mxu0 0.0
        %656 = vmatpush2.msra.mxu0 0.0
        %657 = vmatprep.subr.mxu0 0.0
        %658 = vmatpush2.msra.mxu0 0.0
        %659 = vmatprep.subr.mxu0 0.0
        %660 = vmatpush2.msra.mxu0 0.0
        %661 = vmatprep.subr.mxu0 0.0
        %662 = vmatpush2.msra.mxu0 0.0
        %663 = vmatprep.subr.mxu0 0.0
        %664 = vmatpush2.msra.mxu0 0.0
        %665 = vmatprep.subr.mxu0 0.0
        %666 = vmatpush2.msra.mxu0 0.0
        %667 = vmatprep.subr.mxu0 0.0
        %668 = vmatpush2.msra.mxu0 0.0
        %669 = vmatprep.subr.mxu0 0.0
        %670 = vmatpush2.msra.mxu0 0.0
        %671 = vmatprep.subr.mxu0 0.0
        %672 = vmatpush2.msra.mxu0 0.0
        %673 = vmatprep.subr.mxu0 0.0
        %674 = vmatpush2.msra.mxu0 0.0
        %675 = vmatprep.subr.mxu0 0.0
        %676 = vmatpush2.msra.mxu0 0.0
        %677 = vmatprep.mubr.f32.mxu0 0.0
        %678 = vmatmul.mubr.f32.gmra.mxu0 %v253
        %v679 = vpop.f32.mrf.mxu0
        %v680 = vadd.f32 0.0, %v679
        %v681 = vpop.f32.mrf.mxu0
        %682 = vmatprep.mubr.f32.mxu0 0.0
        %683 = vmatmul.mubr.f32.gmra.mxu0 %v256
        %v684 = vpop.f32.mrf.mxu0
        %v685 = vadd.f32 0.0, %v684
        %v686 = vpop.f32.mrf.mxu0
        %687 = vmatprep.mubr.f32.mxu0 0.0
        %688 = vmatmul.mubr.f32.gmra.mxu0 %v259
        %v689 = vpop.f32.mrf.mxu0
        %v690 = vadd.f32 0.0, %v689
        %v691 = vpop.f32.mrf.mxu0
        %692 = vmatprep.mubr.f32.mxu0 0.0
        %693 = vmatmul.mubr.f32.gmra.mxu0 %v262
        %v694 = vpop.f32.mrf.mxu0
        %v695 = vadd.f32 0.0, %v694
        %v696 = vpop.f32.mrf.mxu0
        %697 = vmatprep.mubr.f32.mxu0 0.0
        %698 = vmatmul.mubr.f32.gmra.mxu0 %v265
        %v699 = vpop.f32.mrf.mxu0
        %v700 = vadd.f32 0.0, %v699
        %v701 = vpop.f32.mrf.mxu0
        %702 = vmatprep.mubr.f32.mxu0 0.0
        %703 = vmatmul.mubr.f32.gmra.mxu0 %v268
        %v704 = vpop.f32.mrf.mxu0
        %v705 = vadd.f32 0.0, %v704
        %v706 = vpop.f32.mrf.mxu0
        %707 = vmatprep.mubr.f32.mxu0 0.0
        %708 = vmatmul.mubr.f32.gmra.mxu0 %v271
        %v709 = vpop.f32.mrf.mxu0
        %v710 = vadd.f32 0.0, %v709
        %v711 = vpop.f32.mrf.mxu0
        %712 = vmatprep.mubr.f32.mxu0 0.0
        %713 = vmatmul.mubr.f32.gmra.mxu0 %v274
        %v714 = vpop.f32.mrf.mxu0
        %v715 = vadd.f32 0.0, %v714
        %v716 = vpop.f32.mrf.mxu0
        %717 = vmatprep.mubr.f32.mxu0 0.0
        %718 = vmatmul.mubr.f32.gmra.mxu0 %v277
        %v719 = vpop.f32.mrf.mxu0
        %v720 = vadd.f32 0.0, %v719
        %v721 = vpop.f32.mrf.mxu0
        %722 = vmatprep.mubr.f32.mxu0 0.0
        %723 = vmatmul.mubr.f32.gmra.mxu0 %v280
        %v724 = vpop.f32.mrf.mxu0
        %v725 = vadd.f32 0.0, %v724
        %v726 = vpop.f32.mrf.mxu0
        %727 = vmatprep.mubr.f32.mxu0 0.0
        %728 = vmatmul.mubr.f32.gmra.mxu0 %v283
        %v729 = vpop.f32.mrf.mxu0
        %v730 = vadd.f32 0.0, %v729
        %v731 = vpop.f32.mrf.mxu0
        %732 = vmatprep.mubr.f32.mxu0 0.0
        %733 = vmatmul.mubr.f32.gmra.mxu0 %v286
        %v734 = vpop.f32.mrf.mxu0
        %v735 = vadd.f32 0.0, %v734
        %v736 = vpop.f32.mrf.mxu0
        %737 = vmatprep.mubr.f32.mxu0 0.0
        %738 = vmatmul.mubr.f32.gmra.mxu0 %v289
        %v739 = vpop.f32.mrf.mxu0
        %v740 = vadd.f32 0.0, %v739
        %v741 = vpop.f32.mrf.mxu0
        %742 = vmatprep.mubr.f32.mxu0 0.0
        %743 = vmatmul.mubr.f32.gmra.mxu0 %v292
        %v744 = vpop.f32.mrf.mxu0
        %v745 = vadd.f32 0.0, %v744
        %v746 = vpop.f32.mrf.mxu0
        %747 = vmatprep.mubr.f32.mxu0 0.0
        %748 = vmatmul.mubr.f32.gmra.mxu0 %v295
        %v749 = vpop.f32.mrf.mxu0
        %v750 = vadd.f32 0.0, %v749
        %v751 = vpop.f32.mrf.mxu0
        %752 = vmatprep.mubr.f32.mxu0 0.0
        %753 = vmatmul.mubr.f32.gmra.mxu0 %v298
        %v754 = vpop.f32.mrf.mxu0
        %v755 = vadd.f32 0.0, %v754
        %v756 = vpop.f32.mrf.mxu0
        %757 = vmatprep.mubr.f32.mxu0 0.0
        %758 = vmatmul.mubr.f32.gmra.mxu0 %v301
        %v759 = vpop.f32.mrf.mxu0
        %v760 = vadd.f32 0.0, %v759
        %v761 = vpop.f32.mrf.mxu0
        %762 = vmatprep.mubr.f32.mxu0 0.0
        %763 = vmatmul.mubr.f32.gmra.mxu0 %v304
        %v764 = vpop.f32.mrf.mxu0
        %v765 = vadd.f32 0.0, %v764
        %v766 = vpop.f32.mrf.mxu0
        %767 = vmatprep.mubr.f32.mxu0 0.0
        %768 = vmatmul.mubr.f32.gmra.mxu0 %v307
        %v769 = vpop.f32.mrf.mxu0
        %v770 = vadd.f32 0.0, %v769
        %v771 = vpop.f32.mrf.mxu0
        %772 = vmatprep.mubr.f32.mxu0 0.0
        %773 = vmatmul.mubr.f32.gmra.mxu0 %v310
        %v774 = vpop.f32.mrf.mxu0
        %v775 = vadd.f32 0.0, %v774
        %v776 = vpop.f32.mrf.mxu0
        %777 = vmatprep.mubr.f32.mxu0 0.0
        %778 = vmatmul.mubr.f32.gmra.mxu0 %v313
        %v779 = vpop.f32.mrf.mxu0
        %v780 = vadd.f32 0.0, %v779
        %v781 = vpop.f32.mrf.mxu0
        %782 = vmatprep.mubr.f32.mxu0 0.0
        %783 = vmatmul.mubr.f32.gmra.mxu0 %v316
        %v784 = vpop.f32.mrf.mxu0
        %v785 = vadd.f32 0.0, %v784
        %v786 = vpop.f32.mrf.mxu0
        %787 = vmatprep.mubr.f32.mxu0 0.0
        %788 = vmatmul.mubr.f32.gmra.mxu0 %v319
        %v789 = vpop.f32.mrf.mxu0
        %v790 = vadd.f32 0.0, %v789
        %v791 = vpop.f32.mrf.mxu0
        %792 = vmatprep.mubr.f32.mxu0 0.0
        %793 = vmatmul.mubr.f32.gmra.mxu0 %v322
        %v794 = vpop.f32.mrf.mxu0
        %v795 = vadd.f32 0.0, %v794
        %v796 = vpop.f32.mrf.mxu0
        %797 = vmatprep.mubr.f32.mxu0 0.0
        %798 = vmatmul.mubr.f32.gmra.mxu0 %v325
        %v799 = vpop.f32.mrf.mxu0
        %v800 = vadd.f32 0.0, %v799
        %v801 = vpop.f32.mrf.mxu0
        %802 = vmatprep.mubr.f32.mxu0 0.0
        %803 = vmatmul.mubr.f32.gmra.mxu0 %v328
        %v804 = vpop.f32.mrf.mxu0
        %v805 = vadd.f32 0.0, %v804
        %v806 = vpop.f32.mrf.mxu0
        %807 = vmatprep.mubr.f32.mxu0 0.0
        %808 = vmatmul.mubr.f32.gmra.mxu0 %v331
        %v809 = vpop.f32.mrf.mxu0
        %v810 = vadd.f32 0.0, %v809
        %v811 = vpop.f32.mrf.mxu0
        %812 = vmatprep.mubr.f32.mxu0 0.0
        %813 = vmatmul.mubr.f32.gmra.mxu0 %v334
        %v814 = vpop.f32.mrf.mxu0
        %v815 = vadd.f32 0.0, %v814
        %v816 = vpop.f32.mrf.mxu0
        %817 = vmatprep.mubr.f32.mxu0 0.0
        %818 = vmatmul.mubr.f32.gmra.mxu0 %v337
        %v819 = vpop.f32.mrf.mxu0
        %v820 = vadd.f32 0.0, %v819
        %v821 = vpop.f32.mrf.mxu0
        %822 = vmatprep.mubr.f32.mxu0 0.0
        %823 = vmatmul.mubr.f32.gmra.mxu0 %v340
        %v824 = vpop.f32.mrf.mxu0
        %v825 = vadd.f32 0.0, %v824
        %v826 = vpop.f32.mrf.mxu0
        %827 = vmatprep.mubr.f32.mxu0 0.0
        %828 = vmatmul.mubr.f32.gmra.mxu0 %v343
        %v829 = vpop.f32.mrf.mxu0
        %v830 = vadd.f32 0.0, %v829
        %v831 = vpop.f32.mrf.mxu0
        %832 = vmatprep.mubr.f32.mxu0 0.0
        %833 = vmatmul.mubr.f32.gmra.mxu0 %v346
        %v834 = vpop.f32.mrf.mxu0
        %v835 = vadd.f32 0.0, %v834
        %v836 = vpop.f32.mrf.mxu0
        %837 = vdwg.mxu0
        %v838 = vpack.c.bf16 %v685, %v680
        %v839 = vpack.c.bf16 %v695, %v690
        %v840 = vpack.c.bf16 %v705, %v700
        %v841 = vpack.c.bf16 %v715, %v710
        %v842 = vpack.c.bf16 %v725, %v720
        %v843 = vpack.c.bf16 %v735, %v730
        %v844 = vpack.c.bf16 %v745, %v740
        %v845 = vpack.c.bf16 %v755, %v750
        %v846 = vpack.c.bf16 %v765, %v760
        %v847 = vpack.c.bf16 %v775, %v770
        %v848 = vpack.c.bf16 %v785, %v780
        %v849 = vpack.c.bf16 %v795, %v790
        %v850 = vpack.c.bf16 %v805, %v800
        %v851 = vpack.c.bf16 %v815, %v810
        %v852 = vpack.c.bf16 %v825, %v820
        %v853 = vpack.c.bf16 %v835, %v830
        %v870 = vunpack.c.l.b16 %v838
        %v871 = vunpack.c.h.b16 %v838
        %v872 = vunpack.c.l.b16 %v839
        %v873 = vunpack.c.h.b16 %v839
        %v874 = vunpack.c.l.b16 %v840
        %v875 = vunpack.c.h.b16 %v840
        %v876 = vunpack.c.l.b16 %v841
        %v877 = vunpack.c.h.b16 %v841
        %v878 = vunpack.c.l.b16 %v842
        %v879 = vunpack.c.h.b16 %v842
        %v880 = vunpack.c.l.b16 %v843
        %v881 = vunpack.c.h.b16 %v843
        %v882 = vunpack.c.l.b16 %v844
        %v883 = vunpack.c.h.b16 %v844
        %v884 = vunpack.c.l.b16 %v845
        %v885 = vunpack.c.h.b16 %v845
        %v886 = vunpack.c.l.b16 %v846
        %v887 = vunpack.c.h.b16 %v846
        %v888 = vunpack.c.l.b16 %v847
        %v889 = vunpack.c.h.b16 %v847
        %v890 = vunpack.c.l.b16 %v848
        %v891 = vunpack.c.h.b16 %v848
        %v892 = vunpack.c.l.b16 %v849
        %v893 = vunpack.c.h.b16 %v849
        %v894 = vunpack.c.l.b16 %v850
        %v895 = vunpack.c.h.b16 %v850
        %v896 = vunpack.c.l.b16 %v851
        %v897 = vunpack.c.h.b16 %v851
        %v898 = vunpack.c.l.b16 %v852
        %v899 = vunpack.c.h.b16 %v852
        %v900 = vunpack.c.l.b16 %v853
        %v901 = vunpack.c.h.b16 %v853
        %v902 = vpack.c.b16 %v870, %v870
        %v903 = vpack.c.b16 %v871, %v871
        %v904 = vpack.c.b16 %v872, %v872
        %v905 = vpack.c.b16 %v873, %v873
        %v906 = vpack.c.b16 %v874, %v874
        %v907 = vpack.c.b16 %v875, %v875
        %v908 = vpack.c.b16 %v876, %v876
        %v909 = vpack.c.b16 %v877, %v877
        %v910 = vpack.c.b16 %v878, %v878
        %v911 = vpack.c.b16 %v879, %v879
        %v912 = vpack.c.b16 %v880, %v880
        %v913 = vpack.c.b16 %v881, %v881
        %v914 = vpack.c.b16 %v882, %v882
        %v915 = vpack.c.b16 %v883, %v883
        %v916 = vpack.c.b16 %v884, %v884
        %v917 = vpack.c.b16 %v885, %v885
        %v918 = vpack.c.b16 %v886, %v886
        %v919 = vpack.c.b16 %v887, %v887
        %v920 = vpack.c.b16 %v888, %v888
        %v921 = vpack.c.b16 %v889, %v889
        %v922 = vpack.c.b16 %v890, %v890
        %v923 = vpack.c.b16 %v891, %v891
        %v924 = vpack.c.b16 %v892, %v892
        %v925 = vpack.c.b16 %v893, %v893
        %v926 = vpack.c.b16 %v894, %v894
        %v927 = vpack.c.b16 %v895, %v895
        %v928 = vpack.c.b16 %v896, %v896
        %v929 = vpack.c.b16 %v897, %v897
        %v930 = vpack.c.b16 %v898, %v898
        %v931 = vpack.c.b16 %v899, %v899
        %v932 = vpack.c.b16 %v900, %v900
        %v933 = vpack.c.b16 %v901, %v901
        %966 = vst [vmem:[%s202] sm:$0xf] %v902
        %967 = vst [vmem:[%s202 + $0x4] sm:$0xf] %v903
        %968 = vst [vmem:[%s202 + $0x8] sm:$0xf] %v904
        %969 = vst [vmem:[%s202 + $0xc] sm:$0xf] %v905
        %970 = vst [vmem:[%s202 + $0x10] sm:$0xf] %v906
        %971 = vst [vmem:[%s202 + $0x14] sm:$0xf] %v907
        %972 = vst [vmem:[%s202 + $0x18] sm:$0xf] %v908
        %973 = vst [vmem:[%s202 + $0x1c] sm:$0xf] %v909
        %974 = vst [vmem:[%s202 + $0x20] sm:$0xf] %v910
        %975 = vst [vmem:[%s202 + $0x24] sm:$0xf] %v911
        %976 = vst [vmem:[%s202 + $0x28] sm:$0xf] %v912
        %977 = vst [vmem:[%s202 + $0x2c] sm:$0xf] %v913
        %978 = vst [vmem:[%s202 + $0x30] sm:$0xf] %v914
        %979 = vst [vmem:[%s202 + $0x34] sm:$0xf] %v915
        %980 = vst [vmem:[%s202 + $0x38] sm:$0xf] %v916
        %981 = vst [vmem:[%s202 + $0x3c] sm:$0xf] %v917
        %982 = vst [vmem:[%s202 + $0x40] sm:$0xf] %v918
        %983 = vst [vmem:[%s202 + $0x44] sm:$0xf] %v919
        %984 = vst [vmem:[%s202 + $0x48] sm:$0xf] %v920
        %985 = vst [vmem:[%s202 + $0x4c] sm:$0xf] %v921
        %986 = vst [vmem:[%s202 + $0x50] sm:$0xf] %v922
        %987 = vst [vmem:[%s202 + $0x54] sm:$0xf] %v923
        %988 = vst [vmem:[%s202 + $0x58] sm:$0xf] %v924
        %989 = vst [vmem:[%s202 + $0x5c] sm:$0xf] %v925
        %990 = vst [vmem:[%s202 + $0x60] sm:$0xf] %v926
        %991 = vst [vmem:[%s202 + $0x64] sm:$0xf] %v927
        %992 = vst [vmem:[%s202 + $0x68] sm:$0xf] %v928
        %993 = vst [vmem:[%s202 + $0x6c] sm:$0xf] %v929
        %994 = vst [vmem:[%s202 + $0x70] sm:$0xf] %v930
        %995 = vst [vmem:[%s202 + $0x74] sm:$0xf] %v931
        %996 = vst [vmem:[%s202 + $0x78] sm:$0xf] %v932
        %997 = vst [vmem:[%s202 + $0x7c] sm:$0xf] %v933
        %s998 = sand.u32 %s98, 1
        %s999 = scalar_lea.sflag [#allocation3], %s998
        %s1000 = sand.u32 %s98, 1
        %s1001 = smul.addr %s1000, 256
        %s1002 = scalar_lea.vmem [#allocation2], %s1001
        %s1003 = sand.u32 %s124, 1
        %s1004 = scalar_lea.sflag [#allocation5], %s1003
        %s1005 = sand.u32 %s124, 1
        %s1006 = smul.addr %s1005, 128
        %s1007 = scalar_lea.vmem [#allocation4], %s1006
        // Predicated region
        $region33: #{tpu_custom_call.1} parent=31 // pred_check
          %p1008 = pneg %p108
        $region34: #{tpu_custom_call.1} parent=31 // pred_check_branch
          %1010 = sbr.rel (%p1008) target = $region36
        $region35: #{tpu_custom_call.1} parent=31 // pred_region
          %s1011 = smul.u32 32, %s22
          %s1013 = ssub.s32 4096, 4096
          %1014 = vsyncadd %s999, %s1013
          %s1015 = smul.addr %s1011, 128
          %s1016 = scalar_lea.hbm %s3, %s1015
          %s1017 = sshll.u32 %s1002, 4
          %s1018 = int_to_ptr.vmem [resolvable:$true] %s1017
          %1023 = dma.vmem_to_hbm [thread:$0]  %s1018, 4096, %s1016, %s999, 128, 128, 8
        $region36: #{tpu_custom_call.1} parent=31 // pred_fallthru
          _
        // Predicated region
        $region37: #{tpu_custom_call.1} parent=31 // pred_check
          %p1024 = pneg %p134
        $region38: #{tpu_custom_call.1} parent=31 // pred_check_branch
          %1026 = sbr.rel (%p1024) target = $region40
        $region39: #{tpu_custom_call.1} parent=31 // pred_region
          %s1027 = smul.u32 32, %s22
          %s1029 = ssub.s32 2048, 2048
          %1030 = vsyncadd %s1004, %s1029
          %s1031 = smul.addr %s1027, 64
          %s1032 = scalar_lea.hbm %s4, %s1031
          %s1033 = sshll.u32 %s1007, 4
          %s1034 = int_to_ptr.vmem [resolvable:$true] %s1033
          %1039 = dma.vmem_to_hbm [thread:$0]  %s1034, 2048, %s1032, %s1004, 64, 64, 4
        $region40: #{tpu_custom_call.1} parent=31 // pred_fallthru
          _
      $region32: #{tpu_custom_call.1} parent=5 // pred_fallthru
        _
      %p1040 = scmp.le.s32.totalorder 2, %s17
      // Predicated region
      $region41: #{tpu_custom_call.1} parent=5 // pred_check
        %p1041 = pneg %p1040
      $region42: #{tpu_custom_call.1} parent=5 // pred_check_branch
        %1043 = sbr.rel (%p1041) target = $region44
      $region43: #{tpu_custom_call.1} parent=5 // pred_region
        %s1044 = ssub.s32 %s17, 2
        // Predicated region
        $region45: #{tpu_custom_call.1} parent=43 // pred_check
          %p1045 = pneg %p114
        $region46: #{tpu_custom_call.1} parent=43 // pred_check_branch
          %1047 = sbr.rel (%p1045) target = $region48
        $region47: #{tpu_custom_call.1} parent=43 // pred_region
          %s1048 = sand.u32 %s99, 1
          %s1049 = scalar_lea.sflag [#allocation3], %s1048
          %s1050 = sand.u32 %s99, 1
          %s1051 = smul.addr %s1050, 256
          %s1052 = scalar_lea.vmem [#allocation2], %s1051
          %1053 = dma.done %s1049, 4096
        $region48: #{tpu_custom_call.1} parent=43 // pred_fallthru
          _
        // Predicated region
        $region49: #{tpu_custom_call.1} parent=43 // pred_check
          %p1054 = pneg %p140
        $region50: #{tpu_custom_call.1} parent=43 // pred_check_branch
          %1056 = sbr.rel (%p1054) target = $region52
        $region51: #{tpu_custom_call.1} parent=43 // pred_region
          %s1057 = sand.u32 %s125, 1
          %s1058 = scalar_lea.sflag [#allocation5], %s1057
          %s1059 = sand.u32 %s125, 1
          %s1060 = smul.addr %s1059, 128
          %s1061 = scalar_lea.vmem [#allocation4], %s1060
          %1062 = dma.done %s1058, 2048
        $region52: #{tpu_custom_call.1} parent=43 // pred_fallthru
          _
      $region44: #{tpu_custom_call.1} parent=5 // pred_fallthru
        _
    $region6: #{tpu_custom_call.1} parent=1 // loop_footer
      %s21 = sadd.s32 1, %s17
    $region7: #{tpu_custom_call.1} parent=1 // loop_footer_branch
      %16 = sbr.rel target = $region3
    $region8: #{tpu_custom_call.1} parent=1 // loop_exit
      _
    %1063 = vsyncpa [#allocation3], 1
    %s1064 = scalar_lea.sflag [#allocation3], 1
    %1065 = vsyncpa %s1064, 1
    %1066 = vsyncpa [#allocation5], 1
    %s1067 = scalar_lea.sflag [#allocation5], 1
    %1068 = vsyncpa %s1067, 1

</llo_original>
